<compile_context>
chip_gen: v6e
topology: v6e:2x2x1
jax: 0.10.0
libtpu: 0.0.40
codegen_flags: <defaults>
</compile_context>

<pallas_src>
import jax
import jax.numpy as jnp
from jax.experimental import pallas as pl
from jax.experimental.pallas import tpu as pltpu


LANES = 1024                          # lane-dense last dim -> unmasked vector stores
TARGET_BLOCK_BYTES = 2 * 1024 * 1024  # ~2 MiB per buffer (near-roofline, fits all gens)


def _add_one_scalar_kernel(x_ref, o_ref):
    # Pure scalar path in SMEM.
    o_ref[0] = x_ref[0] + jnp.asarray(1, dtype=o_ref.dtype)


def _add_one_kernel(x_ref, o_ref):
    # VPU elementwise add on a VMEM tile.
    o_ref[...] = x_ref[...] + jnp.asarray(1, dtype=o_ref.dtype)


def _add_one_scalar(x):
    """x + 1 for a single-element 32-bit tensor, entirely in SMEM."""
    orig_shape = x.shape
    x1 = x.reshape((1,))
    out = pl.pallas_call(
        _add_one_scalar_kernel,
        out_shape=jax.ShapeDtypeStruct((1,), x1.dtype),
        in_specs=[pl.BlockSpec(memory_space=pltpu.MemorySpace.SMEM)],
        out_specs=pl.BlockSpec(memory_space=pltpu.MemorySpace.SMEM),
    )(x1)
    return out.reshape(orig_shape)


def _add_one_tiled(x):
    """x + 1 for general tensors via a tiled, pipelined elementwise kernel."""
    orig_shape = x.shape
    n = x.size

    # Choose a 2-D view that is a pure (free) reshape of the input.
    if n % LANES == 0:
        rows, cols = n // LANES, LANES      # lane-dense slab
    elif x.ndim >= 2:
        cols = orig_shape[-1]
        rows = n // cols                    # collapse leading dims, keep full last dim
    else:
        rows, cols = 1, n                   # small 1-D fallback: one full-array block
    slab = x.reshape((rows, cols))

    # Block sizing: ~2 MiB per buffer; at least 2 grid steps for mid-size inputs
    # so both v7x TensorCores participate; sublane-multiple (8) or full-dim rows.
    itemsize = jnp.dtype(slab.dtype).itemsize
    rows_budget = max(8, TARGET_BLOCK_BYTES // max(1, cols * itemsize))
    num_blocks = pl.cdiv(rows, rows_budget)
    if num_blocks == 1 and rows >= 16:
        num_blocks = 2
    block_rows = min(((pl.cdiv(rows, num_blocks) + 7) // 8) * 8, rows)
    grid = (pl.cdiv(rows, block_rows),)

    out = pl.pallas_call(
        _add_one_kernel,
        out_shape=jax.ShapeDtypeStruct(slab.shape, slab.dtype),
        grid=grid,
        in_specs=[pl.BlockSpec((block_rows, cols), lambda i: (i, 0))],
        out_specs=pl.BlockSpec((block_rows, cols), lambda i: (i, 0)),
        compiler_params=pltpu.CompilerParams(
            dimension_semantics=("parallel",)),
        # No input_output_aliases: on this no-pad path it would force XLA to
        # insert a defensive copy (an extra HBM pass) around a mem-bound op.
    )(slab)

    return out.reshape(orig_shape)


def add_one(x):
    """Pallas equivalent of Model.forward: returns x + 1 (same shape/dtype)."""
    x = jnp.asarray(x)
    # SMEM is a 32-bit scalar space; route sub-32-bit size-1 inputs to VMEM.
    if x.size == 1 and jnp.dtype(x.dtype).itemsize == 4:
        return _add_one_scalar(x)
    return _add_one_tiled(x)


if __name__ == "__main__":
    key = jax.random.PRNGKey(0)

    # Primary workload from the spec: a 0-d float32 scalar (torch.tensor(1.0)).
    x = jnp.asarray(1.0, dtype=jnp.float32)
    out = jax.block_until_ready(add_one(x))
    assert out.shape == x.shape and out.dtype == x.dtype
    assert jnp.allclose(out, x + 1.0), (out, x + 1.0)

    # Lane-dense tiled VMEM path (2048 elems -> (2, 1024) slab, no pad/slice).
    x_t = jax.random.normal(key, (2, 4, 16, 16), dtype=jnp.float32)
    out_t = jax.block_until_ready(add_one(x_t))
    assert out_t.shape == x_t.shape and out_t.dtype == x_t.dtype
    assert jnp.allclose(out_t, x_t + 1.0)

    # Non-1024-aligned path: full-last-dim block, still no pad/slice.
    x_u = jax.random.normal(key, (3, 5, 7), dtype=jnp.float32)
    out_u = jax.block_until_ready(add_one(x_u))
    assert out_u.shape == x_u.shape and out_u.dtype == x_u.dtype
    assert jnp.allclose(out_u, x_u + 1.0)

    print("KERNEL_OK")
</pallas_src>

<mosaic_0001>
module attributes {stable_mosaic.version = 11 : i64} {
  func.func @_add_one_scalar_kernel(%arg0: memref<1xf32, #tpu.memory_space<smem>>, %arg1: memref<1xf32, #tpu.memory_space<smem>>) attributes {dimension_semantics = [], scalar_prefetch = 0 : i64, scratch_operands = 0 : i64, tpu.core_type = #tpu.core_type<tc>} {
    %c0 = arith.constant 0 : index
    %0 = memref.load %arg0[%c0] : memref<1xf32, #tpu.memory_space<smem>>
    %cst = arith.constant 1.000000e+00 : f32
    %1 = arith.addf %0, %cst : f32
    %c0_0 = arith.constant 0 : index
    %2 = memref.load %arg1[%c0_0] : memref<1xf32, #tpu.memory_space<smem>>
    memref.store %1, %arg1[%c0_0] : memref<1xf32, #tpu.memory_space<smem>>
    return
  }
}

</mosaic_0001>

<llo_original>
// kernel: tpu_custom_call.1
$region0: #{tpu_custom_call.1}
  #allocation0 [shape = 'u32[]', space=smem, size = 0x4, offset = 0x4, fixed_abs, tag = 'smem constant byte address 0x4 - core index']
  #allocation1 [shape = 'u32[144,128]{1,0:T(1,128)}', space=vmem, size = 0x12000, scoped, tag = 'internal scratch']
  #allocation2 [shape = 'f32[1]{0:T(128)S(6)}', space=smem, size = 0x200, scoped, tag = 'scoped memory for tpu_custom_call.1']
  %s0 = inlined_call_operand.<no memory space> [shape: f32[1], index: 0, kind: input, shape index: {}]
  %s1 = inlined_call_operand.hbm [shape: f32[1], index: 1, kind: output, shape index: {}]
  %s2 = sld [smem:[#allocation0]]
  $region14: #{tpu_custom_call.1} parent=0
    _
  %s4 = ssub.s32 1, %s2
  %s5 = scalar_select 0, %s4, %s2
  %6 = sst [smem:[#allocation2]] %s0
  $region1: #{tpu_custom_call.1} parent=0
    #allocation3 [shape = 'u8[512]{0}', space=smem, size = 0x200, scoped, tag = 'output window, operand 0, single buffered']
    #allocation4 [shape = 's32[1]{0}', space=sflag, size = 0x4, scoped, tag = 'scoped memory for tpu_custom_call.1']
    %7 = vsyncpa [#allocation4], 0
    // Predicated region
    $region2: #{tpu_custom_call.1} parent=1 // pred_check
      _
    $region3: #{tpu_custom_call.1} parent=1 // pred_check_branch
      %9 = sbr.rel (0) target = $region5
    $region4: #{tpu_custom_call.1} parent=1 // pred_region
      _
    $region5: #{tpu_custom_call.1} parent=1 // pred_fallthru
      _
    %s10 = sld [smem:[#allocation2]]
    %s11 = sadd.f32 %s10, 1.0
    %s12 = scalar_lea.smem [#allocation3], 0
    %13 = sst [smem:[%s12]] %s11
    // Predicated region
    $region6: #{tpu_custom_call.1} parent=1 // pred_check
      _
    $region7: #{tpu_custom_call.1} parent=1 // pred_check_branch
      %15 = sbr.rel (0) target = $region9
    $region8: #{tpu_custom_call.1} parent=1 // pred_region
      %s17 = ssub.s32 16, 16
      %18 = vsyncadd [#allocation4], %s17
      %21 = dma.smem_to_hbm [#allocation3], 16, %s1, [#allocation4]
    $region9: #{tpu_custom_call.1} parent=1 // pred_fallthru
      _
    // Predicated region
    $region10: #{tpu_custom_call.1} parent=1 // pred_check
      _
    $region11: #{tpu_custom_call.1} parent=1 // pred_check_branch
      %23 = sbr.rel (0) target = $region13
    $region12: #{tpu_custom_call.1} parent=1 // pred_region
      %24 = dma.done [#allocation4], 16
    $region13: #{tpu_custom_call.1} parent=1 // pred_fallthru
      _
    %25 = sfence
    %26 = vsyncpa [#allocation4], 1

</llo_original>
